<compile_context>
chip_gen: v7x
topology: tpu7x:2x2x1
jax: 0.10.0
libtpu: 0.0.40
codegen_flags: <defaults>
</compile_context>

<pallas_src>
import jax
import jax.numpy as jnp
from jax.experimental import pallas as pl
from jax.experimental.pallas import tpu as pltpu


_DEFAULT_TILE_N = 4096
_VMEM_LIMIT_BYTES = 32 * 1024 * 1024


def _round_up(v, m):
    return (v + m - 1) // m * m


def net_kernel(x_ref,
               w1_ref, b1_ref,      # conv1 (1x1): 24 -> 9
               w2_ref, b2_ref,      # conv2 (1x1): 9 -> 16
               wf1_ref, bf1_ref,    # fc1: 16 -> 90
               wf2_ref, bf2_ref,    # fc2: 90 -> 84
               wf3_ref, bf3_ref,    # fc3: 84 -> 1
               out_ref):
    # Batch on sublanes, features on lanes; weights (Cin, Cout) are the MXU
    # stationary operand.  bf16 multiply, f32 accumulate, f32 bias/ReLU.
    h = x_ref[...].astype(jnp.bfloat16)                                 # (T, 24)

    # conv1 (1x1) + ReLU; max_pool2d with kernel (1,1) is the identity.
    h = jnp.dot(h, w1_ref[...], preferred_element_type=jnp.float32) + b1_ref[...]
    h = jnp.maximum(h, 0.0).astype(jnp.bfloat16)                        # (T, 9)

    # conv2 (1x1) + ReLU; max_pool2d with kernel 1 is the identity.
    h = jnp.dot(h, w2_ref[...], preferred_element_type=jnp.float32) + b2_ref[...]
    h = jnp.maximum(h, 0.0).astype(jnp.bfloat16)                        # (T, 16)

    # flatten (H=W=1) -> 16 features, then the fc stack.
    h = jnp.dot(h, wf1_ref[...], preferred_element_type=jnp.float32) + bf1_ref[...]
    h = jnp.maximum(h, 0.0).astype(jnp.bfloat16)                        # (T, 90)
    h = jnp.dot(h, wf2_ref[...], preferred_element_type=jnp.float32) + bf2_ref[...]
    h = jnp.maximum(h, 0.0).astype(jnp.bfloat16)                        # (T, 84)
    out = jnp.dot(h, wf3_ref[...], preferred_element_type=jnp.float32) + bf3_ref[...]
    out_ref[...] = out.astype(out_ref.dtype)                            # (T, 1)


def _choose_tile(n, tile_n):
    """Pick the batch tile: 8-aligned, and >=2 grid steps when possible (v7x)."""
    if n <= tile_n:
        if n >= 16:
            return min(tile_n, _round_up(pl.cdiv(n, 2), 8))
        return n            # tiny batch: single full-array block (always legal)
    return tile_n


def net_forward(x_nchw, params, *, tile_n=_DEFAULT_TILE_N):
    """x_nchw: (N, 24, 1, 1) float32 -> (N, 1) float32."""
    n, c, h, w = x_nchw.shape
    assert c == 24 and h == 1 and w == 1

    # Free reshape (no transpose, no pad): batch-major (N, 24).
    x_nc = x_nchw.reshape(n, c)

    tile_n = _choose_tile(n, tile_n)
    if tile_n != n:
        assert tile_n % 8 == 0, "batch tile must be 8-aligned when it != N"
    grid = (pl.cdiv(n, tile_n),)

    # Weights/biases: full-array blocks, constant index_map -> VMEM-resident
    # across all grid steps (DMA'd once).
    weight_specs = [pl.BlockSpec(p.shape, lambda i: (0, 0)) for p in params]

    out = pl.pallas_call(
        net_kernel,
        out_shape=jax.ShapeDtypeStruct((n, 1), jnp.float32),
        grid=grid,
        in_specs=[pl.BlockSpec((tile_n, c), lambda i: (i, 0))] + weight_specs,
        out_specs=pl.BlockSpec((tile_n, 1), lambda i: (i, 0)),
        compiler_params=pltpu.CompilerParams(
            dimension_semantics=("parallel",),
            vmem_limit_bytes=_VMEM_LIMIT_BYTES),
    )(x_nc, *params)

    return out                                                          # (N, 1)


def net_ref(x_nchw, params):
    """Pure-JAX reference with the same bf16-multiply / f32-accumulate recipe."""
    w1, b1, w2, b2, wf1, bf1, wf2, bf2, wf3, bf3 = params
    x = x_nchw.reshape(x_nchw.shape[0], -1)                             # (N, 24)

    def layer(h, wgt, bias, relu=True):
        y = jnp.dot(h.astype(jnp.bfloat16), wgt.astype(jnp.bfloat16),
                    preferred_element_type=jnp.float32) + bias
        return jnp.maximum(y, 0.0) if relu else y

    h = layer(x, w1, b1)
    h = layer(h, w2, b2)
    h = layer(h, wf1, bf1)
    h = layer(h, wf2, bf2)
    return layer(h, wf3, bf3, relu=False)                               # (N, 1)


def init_params(key):
    """Deterministic PyTorch-style (uniform +/- 1/sqrt(fan_in)) init.

    Weights stored activation-streaming as (Cin, Cout) in bf16; biases as
    (1, Cout) in f32.
    """
    ks = jax.random.split(key, 10)

    def uw(k, cin, cout):
        bound = 1.0 / float(cin) ** 0.5
        return jax.random.uniform(k, (cin, cout), jnp.float32,
                                  -bound, bound).astype(jnp.bfloat16)

    def ub(k, cin, cout):
        bound = 1.0 / float(cin) ** 0.5
        return jax.random.uniform(k, (1, cout), jnp.float32, -bound, bound)

    w1, b1 = uw(ks[0], 24, 9), ub(ks[1], 24, 9)
    w2, b2 = uw(ks[2], 9, 16), ub(ks[3], 9, 16)
    wf1, bf1 = uw(ks[4], 16, 90), ub(ks[5], 16, 90)
    wf2, bf2 = uw(ks[6], 90, 84), ub(ks[7], 90, 84)
    wf3, bf3 = uw(ks[8], 84, 1), ub(ks[9], 84, 1)
    return (w1, b1, w2, b2, wf1, bf1, wf2, bf2, wf3, bf3)


if __name__ == "__main__":
    key = jax.random.PRNGKey(0)
    kx, kx2, kp = jax.random.split(key, 3)

    params = init_params(kp)

    # Small shape consistent with the module: (N=2, C=24, H=W=1).
    x = jax.random.normal(kx, (2, 24, 1, 1), dtype=jnp.float32)
    out = net_forward(x, params)
    jax.block_until_ready(out)
    assert out.shape == (2, 1) and out.dtype == jnp.float32
    assert jnp.allclose(out, net_ref(x, params), atol=2e-3, rtol=2e-3)

    # Exercise the multi-step / ragged-final-block paths:
    #  - default tile: split into 2 parallel 8-aligned tiles (last one ragged)
    #  - explicit small tile: 3-step pipelined grid with a ragged final block
    x2 = jax.random.normal(kx2, (300, 24, 1, 1), dtype=jnp.float32)
    ref2 = net_ref(x2, params)

    out2 = net_forward(x2, params)
    jax.block_until_ready(out2)
    assert out2.shape == (300, 1)
    assert jnp.allclose(out2, ref2, atol=2e-3, rtol=2e-3)

    out3 = net_forward(x2, params, tile_n=128)
    jax.block_until_ready(out3)
    assert out3.shape == (300, 1)
    assert jnp.allclose(out3, ref2, atol=2e-3, rtol=2e-3)

    print("KERNEL_OK")
</pallas_src>

<mosaic_0001>
module attributes {stable_mosaic.version = 11 : i64} {
  func.func @net_kernel(%arg0: i32, %arg1: memref<2x24xf32, #tpu.memory_space<vmem>>, %arg2: memref<24x9xbf16, #tpu.memory_space<vmem>>, %arg3: memref<1x9xf32, #tpu.memory_space<vmem>>, %arg4: memref<9x16xbf16, #tpu.memory_space<vmem>>, %arg5: memref<1x16xf32, #tpu.memory_space<vmem>>, %arg6: memref<16x90xbf16, #tpu.memory_space<vmem>>, %arg7: memref<1x90xf32, #tpu.memory_space<vmem>>, %arg8: memref<90x84xbf16, #tpu.memory_space<vmem>>, %arg9: memref<1x84xf32, #tpu.memory_space<vmem>>, %arg10: memref<84x1xbf16, #tpu.memory_space<vmem>>, %arg11: memref<1x1xf32, #tpu.memory_space<vmem>>, %arg12: memref<2x1xf32, #tpu.memory_space<vmem>>) attributes {dimension_semantics = [#tpu.dimension_semantics<parallel>], iteration_bounds = array<i64: 1>, scalar_prefetch = 0 : i64, scratch_operands = 0 : i64, tpu.core_type = #tpu.core_type<tc>, window_params = [{transform_indices = @transform_0, window_bounds = array<i64: 2, 24>}, {pipeline_mode = #tpu.pipeline_mode<synchronous>, transform_indices = @transform_1, window_bounds = array<i64: 24, 9>}, {pipeline_mode = #tpu.pipeline_mode<synchronous>, transform_indices = @transform_2, window_bounds = array<i64: 1, 9>}, {pipeline_mode = #tpu.pipeline_mode<synchronous>, transform_indices = @transform_3, window_bounds = array<i64: 9, 16>}, {pipeline_mode = #tpu.pipeline_mode<synchronous>, transform_indices = @transform_4, window_bounds = array<i64: 1, 16>}, {pipeline_mode = #tpu.pipeline_mode<synchronous>, transform_indices = @transform_5, window_bounds = array<i64: 16, 90>}, {pipeline_mode = #tpu.pipeline_mode<synchronous>, transform_indices = @transform_6, window_bounds = array<i64: 1, 90>}, {pipeline_mode = #tpu.pipeline_mode<synchronous>, transform_indices = @transform_7, window_bounds = array<i64: 90, 84>}, {pipeline_mode = #tpu.pipeline_mode<synchronous>, transform_indices = @transform_8, window_bounds = array<i64: 1, 84>}, {pipeline_mode = #tpu.pipeline_mode<synchronous>, transform_indices = @transform_9, window_bounds = array<i64: 84, 1>}, {pipeline_mode = #tpu.pipeline_mode<synchronous>, transform_indices = @transform_10, window_bounds = array<i64: 1, 1>}, {transform_indices = @transform_11, window_bounds = array<i64: 2, 1>}]} {
    %c0 = arith.constant 0 : index
    %c0_0 = arith.constant 0 : index
    %0 = vector.load %arg1[%c0, %c0_0] : memref<2x24xf32, #tpu.memory_space<vmem>>, vector<2x24xf32>
    %1 = arith.truncf %0 : vector<2x24xf32> to vector<2x24xbf16>
    %c0_1 = arith.constant 0 : index
    %c0_2 = arith.constant 0 : index
    %2 = vector.load %arg2[%c0_1, %c0_2] : memref<24x9xbf16, #tpu.memory_space<vmem>>, vector<24x9xbf16>
    %cst = arith.constant dense<0.000000e+00> : vector<2x9xf32>
    %3 = tpu.matmul %1, %2, %cst {dimension_numbers = #tpu.dot_dimension_numbers<[1], [0], [0], [1], [0, 0, 1, 1], [], []>} : vector<2x24xbf16>, vector<24x9xbf16>, vector<2x9xf32> -> vector<2x9xf32>
    %c0_3 = arith.constant 0 : index
    %c0_4 = arith.constant 0 : index
    %4 = vector.load %arg3[%c0_3, %c0_4] : memref<1x9xf32, #tpu.memory_space<vmem>>, vector<1x9xf32>
    %5 = vector.broadcast %4 : vector<1x9xf32> to vector<2x9xf32>
    %6 = arith.addf %3, %5 : vector<2x9xf32>
    %cst_5 = arith.constant 0.000000e+00 : f32
    %7 = vector.broadcast %cst_5 : f32 to vector<2x9xf32>
    %8 = arith.maximumf %6, %7 : vector<2x9xf32>
    %9 = arith.truncf %8 : vector<2x9xf32> to vector<2x9xbf16>
    %c0_6 = arith.constant 0 : index
    %c0_7 = arith.constant 0 : index
    %10 = vector.load %arg4[%c0_6, %c0_7] : memref<9x16xbf16, #tpu.memory_space<vmem>>, vector<9x16xbf16>
    %cst_8 = arith.constant dense<0.000000e+00> : vector<2x16xf32>
    %11 = tpu.matmul %9, %10, %cst_8 {dimension_numbers = #tpu.dot_dimension_numbers<[1], [0], [0], [1], [0, 0, 1, 1], [], []>} : vector<2x9xbf16>, vector<9x16xbf16>, vector<2x16xf32> -> vector<2x16xf32>
    %c0_9 = arith.constant 0 : index
    %c0_10 = arith.constant 0 : index
    %12 = vector.load %arg5[%c0_9, %c0_10] : memref<1x16xf32, #tpu.memory_space<vmem>>, vector<1x16xf32>
    %13 = vector.broadcast %12 : vector<1x16xf32> to vector<2x16xf32>
    %14 = arith.addf %11, %13 : vector<2x16xf32>
    %cst_11 = arith.constant 0.000000e+00 : f32
    %15 = vector.broadcast %cst_11 : f32 to vector<2x16xf32>
    %16 = arith.maximumf %14, %15 : vector<2x16xf32>
    %17 = arith.truncf %16 : vector<2x16xf32> to vector<2x16xbf16>
    %c0_12 = arith.constant 0 : index
    %c0_13 = arith.constant 0 : index
    %18 = vector.load %arg6[%c0_12, %c0_13] : memref<16x90xbf16, #tpu.memory_space<vmem>>, vector<16x90xbf16>
    %cst_14 = arith.constant dense<0.000000e+00> : vector<2x90xf32>
    %19 = tpu.matmul %17, %18, %cst_14 {dimension_numbers = #tpu.dot_dimension_numbers<[1], [0], [0], [1], [0, 0, 1, 1], [], []>} : vector<2x16xbf16>, vector<16x90xbf16>, vector<2x90xf32> -> vector<2x90xf32>
    %c0_15 = arith.constant 0 : index
    %c0_16 = arith.constant 0 : index
    %20 = vector.load %arg7[%c0_15, %c0_16] : memref<1x90xf32, #tpu.memory_space<vmem>>, vector<1x90xf32>
    %21 = vector.broadcast %20 : vector<1x90xf32> to vector<2x90xf32>
    %22 = arith.addf %19, %21 : vector<2x90xf32>
    %cst_17 = arith.constant 0.000000e+00 : f32
    %23 = vector.broadcast %cst_17 : f32 to vector<2x90xf32>
    %24 = arith.maximumf %22, %23 : vector<2x90xf32>
    %25 = arith.truncf %24 : vector<2x90xf32> to vector<2x90xbf16>
    %c0_18 = arith.constant 0 : index
    %c0_19 = arith.constant 0 : index
    %26 = vector.load %arg8[%c0_18, %c0_19] : memref<90x84xbf16, #tpu.memory_space<vmem>>, vector<90x84xbf16>
    %cst_20 = arith.constant dense<0.000000e+00> : vector<2x84xf32>
    %27 = tpu.matmul %25, %26, %cst_20 {dimension_numbers = #tpu.dot_dimension_numbers<[1], [0], [0], [1], [0, 0, 1, 1], [], []>} : vector<2x90xbf16>, vector<90x84xbf16>, vector<2x84xf32> -> vector<2x84xf32>
    %c0_21 = arith.constant 0 : index
    %c0_22 = arith.constant 0 : index
    %28 = vector.load %arg9[%c0_21, %c0_22] : memref<1x84xf32, #tpu.memory_space<vmem>>, vector<1x84xf32>
    %29 = vector.broadcast %28 : vector<1x84xf32> to vector<2x84xf32>
    %30 = arith.addf %27, %29 : vector<2x84xf32>
    %cst_23 = arith.constant 0.000000e+00 : f32
    %31 = vector.broadcast %cst_23 : f32 to vector<2x84xf32>
    %32 = arith.maximumf %30, %31 : vector<2x84xf32>
    %33 = arith.truncf %32 : vector<2x84xf32> to vector<2x84xbf16>
    %c0_24 = arith.constant 0 : index
    %c0_25 = arith.constant 0 : index
    %34 = vector.load %arg10[%c0_24, %c0_25] : memref<84x1xbf16, #tpu.memory_space<vmem>>, vector<84x1xbf16>
    %cst_26 = arith.constant dense<0.000000e+00> : vector<2x1xf32>
    %35 = tpu.matmul %33, %34, %cst_26 {dimension_numbers = #tpu.dot_dimension_numbers<[1], [0], [0], [1], [0, 0, 1, 1], [], []>} : vector<2x84xbf16>, vector<84x1xbf16>, vector<2x1xf32> -> vector<2x1xf32>
    %c0_27 = arith.constant 0 : index
    %c0_28 = arith.constant 0 : index
    %36 = vector.load %arg11[%c0_27, %c0_28] : memref<1x1xf32, #tpu.memory_space<vmem>>, vector<1x1xf32>
    %37 = vector.broadcast %36 : vector<1x1xf32> to vector<2x1xf32>
    %38 = arith.addf %35, %37 : vector<2x1xf32>
    %c0_29 = arith.constant 0 : index
    %c0_30 = arith.constant 0 : index
    %39 = vector.load %arg12[%c0_29, %c0_30] : memref<2x1xf32, #tpu.memory_space<vmem>>, vector<2x1xf32>
    tpu.vector_store %arg12[%c0_29, %c0_30], %38 {strides = array<i32>} : memref<2x1xf32, #tpu.memory_space<vmem>>, vector<2x1xf32>,
    return
  }
  func.func @transform_0(%arg0: i32) -> (i32, i32) {
    %c0_i32 = arith.constant 0 : i32
    %c0_i32_0 = arith.constant 0 : i32
    return %arg0, %c0_i32 : i32, i32
  }
  func.func @transform_1(%arg0: i32) -> (i32, i32) {
    %c0_i32 = arith.constant 0 : i32
    %c0_i32_0 = arith.constant 0 : i32
    %c0_i32_1 = arith.constant 0 : i32
    return %c0_i32, %c0_i32_0 : i32, i32
  }
  func.func @transform_2(%arg0: i32) -> (i32, i32) {
    %c0_i32 = arith.constant 0 : i32
    %c0_i32_0 = arith.constant 0 : i32
    %c0_i32_1 = arith.constant 0 : i32
    return %c0_i32, %c0_i32_0 : i32, i32
  }
  func.func @transform_3(%arg0: i32) -> (i32, i32) {
    %c0_i32 = arith.constant 0 : i32
    %c0_i32_0 = arith.constant 0 : i32
    %c0_i32_1 = arith.constant 0 : i32
    return %c0_i32, %c0_i32_0 : i32, i32
  }
  func.func @transform_4(%arg0: i32) -> (i32, i32) {
    %c0_i32 = arith.constant 0 : i32
    %c0_i32_0 = arith.constant 0 : i32
    %c0_i32_1 = arith.constant 0 : i32
    return %c0_i32, %c0_i32_0 : i32, i32
  }
  func.func @transform_5(%arg0: i32) -> (i32, i32) {
    %c0_i32 = arith.constant 0 : i32
    %c0_i32_0 = arith.constant 0 : i32
    %c0_i32_1 = arith.constant 0 : i32
    return %c0_i32, %c0_i32_0 : i32, i32
  }
  func.func @transform_6(%arg0: i32) -> (i32, i32) {
    %c0_i32 = arith.constant 0 : i32
    %c0_i32_0 = arith.constant 0 : i32
    %c0_i32_1 = arith.constant 0 : i32
    return %c0_i32, %c0_i32_0 : i32, i32
  }
  func.func @transform_7(%arg0: i32) -> (i32, i32) {
    %c0_i32 = arith.constant 0 : i32
    %c0_i32_0 = arith.constant 0 : i32
    %c0_i32_1 = arith.constant 0 : i32
    return %c0_i32, %c0_i32_0 : i32, i32
  }
  func.func @transform_8(%arg0: i32) -> (i32, i32) {
    %c0_i32 = arith.constant 0 : i32
    %c0_i32_0 = arith.constant 0 : i32
    %c0_i32_1 = arith.constant 0 : i32
    return %c0_i32, %c0_i32_0 : i32, i32
  }
  func.func @transform_9(%arg0: i32) -> (i32, i32) {
    %c0_i32 = arith.constant 0 : i32
    %c0_i32_0 = arith.constant 0 : i32
    %c0_i32_1 = arith.constant 0 : i32
    return %c0_i32, %c0_i32_0 : i32, i32
  }
  func.func @transform_10(%arg0: i32) -> (i32, i32) {
    %c0_i32 = arith.constant 0 : i32
    %c0_i32_0 = arith.constant 0 : i32
    %c0_i32_1 = arith.constant 0 : i32
    return %c0_i32, %c0_i32_0 : i32, i32
  }
  func.func @transform_11(%arg0: i32) -> (i32, i32) {
    %c0_i32 = arith.constant 0 : i32
    %c0_i32_0 = arith.constant 0 : i32
    return %arg0, %c0_i32 : i32, i32
  }
}

</mosaic_0001>

<llo_original>
// kernel: tpu_custom_call.1
$region0: #{tpu_custom_call.1}
  #allocation0 [shape = 'u32[]', space=smem, size = 0x4, offset = 0x4, fixed_abs, tag = 'smem constant byte address 0x4 - core index']
  #allocation1 [shape = 'u32[144,128]{1,0:T(1,128)}', space=vmem, size = 0x12000, scoped, tag = 'internal scratch']
  #allocation2 [shape = 'f32[1,1]{1,0:T(1,128)S(1)}', space=vmem, size = 0x200, scoped, tag = 'scoped memory for tpu_custom_call.1']
  %s0 = inlined_call_operand.vmem [shape: f32[2,24], index: 0, kind: input, shape index: {}]
  %s1 = inlined_call_operand.vmem [shape: bf16[24,9], index: 1, kind: input, shape index: {}]
  %s2 = inlined_call_operand.vmem [shape: f32[1,9], index: 2, kind: input, shape index: {}]
  %s3 = inlined_call_operand.vmem [shape: bf16[9,16], index: 3, kind: input, shape index: {}]
  %s4 = inlined_call_operand.vmem [shape: f32[1,16], index: 4, kind: input, shape index: {}]
  %s5 = inlined_call_operand.vmem [shape: bf16[16,90], index: 5, kind: input, shape index: {}]
  %s6 = inlined_call_operand.vmem [shape: f32[1,90], index: 6, kind: input, shape index: {}]
  %s7 = inlined_call_operand.vmem [shape: bf16[90,84], index: 7, kind: input, shape index: {}]
  %s8 = inlined_call_operand.vmem [shape: f32[1,84], index: 8, kind: input, shape index: {}]
  %s9 = inlined_call_operand.vmem [shape: bf16[84,1], index: 9, kind: input, shape index: {}]
  %s10 = inlined_call_operand.<no memory space> [shape: f32[1,1], index: 10, kind: input, shape index: {}]
  %s11 = inlined_call_operand.vmem [shape: f32[2,1], index: 11, kind: output, shape index: {}]
  %s12 = sld [smem:[#allocation0]]
  $region54: #{tpu_custom_call.1} parent=0
    _
  %s14 = ssub.s32 1, %s12
  %s15 = scalar_select 0, %s14, %s12
  %v16 = vstv %s10
  %17 = vst [vmem:[#allocation2] sm:$0x1] %v16
  // Predicated region
  $region2: #{tpu_custom_call.1} parent=0 // pred_check
    _
  $region3: #{tpu_custom_call.1} parent=0 // pred_check_branch
    %19 = sbr.rel (0) target = $region5
  $region4: #{tpu_custom_call.1} parent=0 // pred_region
    _
  $region5: #{tpu_custom_call.1} parent=0 // pred_fallthru
    _
  // Predicated region
  $region6: #{tpu_custom_call.1} parent=0 // pred_check
    _
  $region7: #{tpu_custom_call.1} parent=0 // pred_check_branch
    %21 = sbr.rel (0) target = $region9
  $region8: #{tpu_custom_call.1} parent=0 // pred_region
    _
  $region9: #{tpu_custom_call.1} parent=0 // pred_fallthru
    _
  // Predicated region
  $region10: #{tpu_custom_call.1} parent=0 // pred_check
    _
  $region11: #{tpu_custom_call.1} parent=0 // pred_check_branch
    %23 = sbr.rel (0) target = $region13
  $region12: #{tpu_custom_call.1} parent=0 // pred_region
    _
  $region13: #{tpu_custom_call.1} parent=0 // pred_fallthru
    _
  // Predicated region
  $region14: #{tpu_custom_call.1} parent=0 // pred_check
    _
  $region15: #{tpu_custom_call.1} parent=0 // pred_check_branch
    %25 = sbr.rel (0) target = $region17
  $region16: #{tpu_custom_call.1} parent=0 // pred_region
    _
  $region17: #{tpu_custom_call.1} parent=0 // pred_fallthru
    _
  // Predicated region
  $region18: #{tpu_custom_call.1} parent=0 // pred_check
    _
  $region19: #{tpu_custom_call.1} parent=0 // pred_check_branch
    %27 = sbr.rel (0) target = $region21
  $region20: #{tpu_custom_call.1} parent=0 // pred_region
    _
  $region21: #{tpu_custom_call.1} parent=0 // pred_fallthru
    _
  // Predicated region
  $region22: #{tpu_custom_call.1} parent=0 // pred_check
    _
  $region23: #{tpu_custom_call.1} parent=0 // pred_check_branch
    %29 = sbr.rel (0) target = $region25
  $region24: #{tpu_custom_call.1} parent=0 // pred_region
    _
  $region25: #{tpu_custom_call.1} parent=0 // pred_fallthru
    _
  // Predicated region
  $region26: #{tpu_custom_call.1} parent=0 // pred_check
    _
  $region27: #{tpu_custom_call.1} parent=0 // pred_check_branch
    %31 = sbr.rel (0) target = $region29
  $region28: #{tpu_custom_call.1} parent=0 // pred_region
    _
  $region29: #{tpu_custom_call.1} parent=0 // pred_fallthru
    _
  // Predicated region
  $region30: #{tpu_custom_call.1} parent=0 // pred_check
    _
  $region31: #{tpu_custom_call.1} parent=0 // pred_check_branch
    %33 = sbr.rel (0) target = $region33
  $region32: #{tpu_custom_call.1} parent=0 // pred_region
    _
  $region33: #{tpu_custom_call.1} parent=0 // pred_fallthru
    _
  // Predicated region
  $region34: #{tpu_custom_call.1} parent=0 // pred_check
    _
  $region35: #{tpu_custom_call.1} parent=0 // pred_check_branch
    %35 = sbr.rel (0) target = $region37
  $region36: #{tpu_custom_call.1} parent=0 // pred_region
    _
  $region37: #{tpu_custom_call.1} parent=0 // pred_fallthru
    _
  // Predicated region
  $region38: #{tpu_custom_call.1} parent=0 // pred_check
    _
  $region39: #{tpu_custom_call.1} parent=0 // pred_check_branch
    %37 = sbr.rel (0) target = $region41
  $region40: #{tpu_custom_call.1} parent=0 // pred_region
    _
  $region41: #{tpu_custom_call.1} parent=0 // pred_fallthru
    _
  // Predicated region
  $region42: #{tpu_custom_call.1} parent=0 // pred_check
    _
  $region43: #{tpu_custom_call.1} parent=0 // pred_check_branch
    %39 = sbr.rel (0) target = $region45
  $region44: #{tpu_custom_call.1} parent=0 // pred_region
    _
  $region45: #{tpu_custom_call.1} parent=0 // pred_fallthru
    _
  %v41 = vld [vmem:[%s0] sm:$0x3]
  %v42 = vpack.c.bf16 %v41, %v41
  %v43 = vld [vmem:[%s1] sm:$0xf]
  %v44 = vld [vmem:[%s1 + $0x4] sm:$0xf]
  %v45 = vld [vmem:[%s1 + $0x8] sm:$0xf]
  %v46 = vld [vmem:[%s2] sm:$0x1]
  %v48 = vlaneseq
  %v49 = vshrl.u32 %v48, 7
  %v50 = vsub.s32 0, %v49
  %v51 = vrot.slane %v46, %v50
  %v56 = vunpack.c.l.b16 %v43
  %v57 = vunpack.c.l.b16 %v44
  %v58 = vunpack.c.l.b16 %v45
  %v59 = vpack.c.b16 %v57, %v56
  %v60 = vpack.c.b16 %v58, %v58
  %vm62 = vcmask 195584
  %v64 = vsel %vm62, %v42, 0
  %vm66 = vcmask 1043456
  %v68 = vsel %vm66, %v60, 0
  %70 = vmatprep.subr.bf16.mxu0 0
  %71 = vmatpush1.bf16.msra.mxu0 %v59
  %72 = vmatprep.subr.bf16.mxu0 0
  %73 = vmatpush1.bf16.msra.mxu0 %v68
  %74 = vmatprep.subr.bf16.mxu0 0
  %75 = vmatpush1.bf16.msra.mxu0 0
  %76 = vmatprep.subr.bf16.mxu0 0
  %77 = vmatpush1.bf16.msra.mxu0 0
  %78 = vmatprep.subr.bf16.mxu0 0
  %79 = vmatpush1.bf16.msra.mxu0 0
  %80 = vmatprep.subr.bf16.mxu0 0
  %81 = vmatpush1.bf16.msra.mxu0 0
  %82 = vmatprep.subr.bf16.mxu0 0
  %83 = vmatpush1.bf16.msra.mxu0 0
  %84 = vmatprep.subr.bf16.mxu0 0
  %85 = vmatpush1.bf16.msra.mxu0 0
  %86 = vmatprep.subr.bf16.mxu0 0
  %87 = vmatpush1.bf16.msra.mxu0 0
  %88 = vmatprep.subr.bf16.mxu0 0
  %89 = vmatpush1.bf16.msra.mxu0 0
  %90 = vmatprep.subr.bf16.mxu0 0
  %91 = vmatpush1.bf16.msra.mxu0 0
  %92 = vmatprep.subr.bf16.mxu0 0
  %93 = vmatpush1.bf16.msra.mxu0 0
  %94 = vmatprep.subr.bf16.mxu0 0
  %95 = vmatpush1.bf16.msra.mxu0 0
  %96 = vmatprep.subr.bf16.mxu0 0
  %97 = vmatpush1.bf16.msra.mxu0 0
  %98 = vmatprep.subr.bf16.mxu0 0
  %99 = vmatpush1.bf16.msra.mxu0 0
  %100 = vmatprep.subr.bf16.mxu0 0
  %101 = vmatpush1.bf16.msra.mxu0 0
  %102 = vmatprep.mubr.bf16.mxu0 0
  %103 = vmatmul.mubr.bf16.gmra.mrb[0].mxu0 %v64
  %v104 = vpop.f32.mrb[0].mxu0
  %v105 = vadd.f32 %v51, %v104
  %v106 = vpop.f32.mrb[0].mxu0
  %v107 = vpop.f32.mrb[0].mxu0
  %v108 = vpop.f32.mrb[0].mxu0
  %109 = vdwg.mxu0
  %v110 = vmax.f32 %v105, 0.0
  %v111 = vpack.c.bf16 %v110, %v110
  %v112 = vld [vmem:[%s3] sm:$0xf]
  %v113 = vld [vmem:[%s3 + $0x4] sm:$0x1]
  %v114 = vld [vmem:[%s4] sm:$0x1]
  %v116 = vlaneseq
  %v117 = vshrl.u32 %v116, 7
  %v118 = vsub.s32 0, %v117
  %v119 = vrot.slane %v114, %v118
  %v123 = vunpack.c.l.b16 %v112
  %v124 = vunpack.c.l.b16 %v113
  %v125 = vpack.c.b16 %v124, %v123
  %vm126 = vcmask 72704
  %v128 = vsel %vm126, %v111, 0
  %vm130 = vcmask 1044480
  %v131 = vsel %vm66, 4294967295, 65535
  %v132 = vsel %vm130, %v131, 0
  %v134 = vand.u32 %v125, %v132
  %136 = vmatprep.subr.bf16.mxu0 0
  %137 = vmatpush1.bf16.msra.mxu0 %v134
  %138 = vmatprep.subr.bf16.mxu0 0
  %139 = vmatpush1.bf16.msra.mxu0 0
  %140 = vmatprep.subr.bf16.mxu0 0
  %141 = vmatpush1.bf16.msra.mxu0 0
  %142 = vmatprep.subr.bf16.mxu0 0
  %143 = vmatpush1.bf16.msra.mxu0 0
  %144 = vmatprep.subr.bf16.mxu0 0
  %145 = vmatpush1.bf16.msra.mxu0 0
  %146 = vmatprep.subr.bf16.mxu0 0
  %147 = vmatpush1.bf16.msra.mxu0 0
  %148 = vmatprep.subr.bf16.mxu0 0
  %149 = vmatpush1.bf16.msra.mxu0 0
  %150 = vmatprep.subr.bf16.mxu0 0
  %151 = vmatpush1.bf16.msra.mxu0 0
  %152 = vmatprep.subr.bf16.mxu0 0
  %153 = vmatpush1.bf16.msra.mxu0 0
  %154 = vmatprep.subr.bf16.mxu0 0
  %155 = vmatpush1.bf16.msra.mxu0 0
  %156 = vmatprep.subr.bf16.mxu0 0
  %157 = vmatpush1.bf16.msra.mxu0 0
  %158 = vmatprep.subr.bf16.mxu0 0
  %159 = vmatpush1.bf16.msra.mxu0 0
  %160 = vmatprep.subr.bf16.mxu0 0
  %161 = vmatpush1.bf16.msra.mxu0 0
  %162 = vmatprep.subr.bf16.mxu0 0
  %163 = vmatpush1.bf16.msra.mxu0 0
  %164 = vmatprep.subr.bf16.mxu0 0
  %165 = vmatpush1.bf16.msra.mxu0 0
  %166 = vmatprep.subr.bf16.mxu0 0
  %167 = vmatpush1.bf16.msra.mxu0 0
  %168 = vmatprep.mubr.bf16.mxu0 0
  %169 = vmatmul.mubr.bf16.gmra.mrb[0].mxu0 %v128
  %v170 = vpop.f32.mrb[0].mxu0
  %v171 = vadd.f32 %v119, %v170
  %v172 = vpop.f32.mrb[0].mxu0
  %v173 = vpop.f32.mrb[0].mxu0
  %v174 = vpop.f32.mrb[0].mxu0
  %175 = vdwg.mxu0
  %v176 = vmax.f32 %v171, 0.0
  %v177 = vpack.c.bf16 %v176, %v176
  %v178 = vld [vmem:[%s5] sm:$0xf]
  %v179 = vld [vmem:[%s5 + $0x4] sm:$0xf]
  %v180 = vld [vmem:[%s6] sm:$0x1]
  %v182 = vlaneseq
  %v183 = vshrl.u32 %v182, 7
  %v184 = vsub.s32 0, %v183
  %v185 = vrot.slane %v180, %v184
  %v189 = vunpack.c.l.b16 %v178
  %v190 = vunpack.c.l.b16 %v179
  %v191 = vpack.c.b16 %v190, %v189
  %vm193 = vcmask 130048
  %v195 = vsel %vm193, %v177, 0
  %197 = vmatprep.subr.bf16.mxu0 0
  %198 = vmatpush1.bf16.msra.mxu0 %v191
  %199 = vmatprep.subr.bf16.mxu0 0
  %200 = vmatpush1.bf16.msra.mxu0 0
  %201 = vmatprep.subr.bf16.mxu0 0
  %202 = vmatpush1.bf16.msra.mxu0 0
  %203 = vmatprep.subr.bf16.mxu0 0
  %204 = vmatpush1.bf16.msra.mxu0 0
  %205 = vmatprep.subr.bf16.mxu0 0
  %206 = vmatpush1.bf16.msra.mxu0 0
  %207 = vmatprep.subr.bf16.mxu0 0
  %208 = vmatpush1.bf16.msra.mxu0 0
  %209 = vmatprep.subr.bf16.mxu0 0
  %210 = vmatpush1.bf16.msra.mxu0 0
  %211 = vmatprep.subr.bf16.mxu0 0
  %212 = vmatpush1.bf16.msra.mxu0 0
  %213 = vmatprep.subr.bf16.mxu0 0
  %214 = vmatpush1.bf16.msra.mxu0 0
  %215 = vmatprep.subr.bf16.mxu0 0
  %216 = vmatpush1.bf16.msra.mxu0 0
  %217 = vmatprep.subr.bf16.mxu0 0
  %218 = vmatpush1.bf16.msra.mxu0 0
  %219 = vmatprep.subr.bf16.mxu0 0
  %220 = vmatpush1.bf16.msra.mxu0 0
  %221 = vmatprep.subr.bf16.mxu0 0
  %222 = vmatpush1.bf16.msra.mxu0 0
  %223 = vmatprep.subr.bf16.mxu0 0
  %224 = vmatpush1.bf16.msra.mxu0 0
  %225 = vmatprep.subr.bf16.mxu0 0
  %226 = vmatpush1.bf16.msra.mxu0 0
  %227 = vmatprep.subr.bf16.mxu0 0
  %228 = vmatpush1.bf16.msra.mxu0 0
  %229 = vmatprep.mubr.bf16.mxu0 0
  %230 = vmatmul.mubr.bf16.gmra.mrb[0].mxu0 %v195
  %v231 = vpop.f32.mrb[0].mxu0
  %v232 = vadd.f32 %v185, %v231
  %v233 = vpop.f32.mrb[0].mxu0
  %v234 = vpop.f32.mrb[0].mxu0
  %v235 = vpop.f32.mrb[0].mxu0
  %236 = vdwg.mxu0
  %v237 = vmax.f32 %v232, 0.0
  %v238 = vpack.c.bf16 %v237, %v237
  %v239 = vld [vmem:[%s7] sm:$0xf]
  %v240 = vld [vmem:[%s7 + $0x4] sm:$0xf]
  %v241 = vld [vmem:[%s7 + $0x8] sm:$0xf]
  %v242 = vld [vmem:[%s7 + $0xc] sm:$0xf]
  %v243 = vld [vmem:[%s7 + $0x10] sm:$0xf]
  %v244 = vld [vmem:[%s7 + $0x14] sm:$0xf]
  %v245 = vld [vmem:[%s7 + $0x18] sm:$0xf]
  %v246 = vld [vmem:[%s7 + $0x1c] sm:$0xf]
  %v247 = vld [vmem:[%s7 + $0x20] sm:$0xf]
  %v248 = vld [vmem:[%s7 + $0x24] sm:$0xf]
  %v249 = vld [vmem:[%s7 + $0x28] sm:$0xf]
  %v250 = vld [vmem:[%s7 + $0x2c] sm:$0x1]
  %v251 = vld [vmem:[%s8] sm:$0x1]
  %v253 = vlaneseq
  %v254 = vshrl.u32 %v253, 7
  %v255 = vsub.s32 0, %v254
  %v256 = vrot.slane %v251, %v255
  %v270 = vunpack.c.l.b16 %v239
  %v271 = vunpack.c.l.b16 %v240
  %v272 = vunpack.c.l.b16 %v241
  %v273 = vunpack.c.l.b16 %v242
  %v274 = vunpack.c.l.b16 %v243
  %v275 = vunpack.c.l.b16 %v244
  %v276 = vunpack.c.l.b16 %v245
  %v277 = vunpack.c.l.b16 %v246
  %v278 = vunpack.c.l.b16 %v247
  %v279 = vunpack.c.l.b16 %v248
  %v280 = vunpack.c.l.b16 %v249
  %v281 = vunpack.c.l.b16 %v250
  %v282 = vpack.c.b16 %v271, %v270
  %v283 = vpack.c.b16 %v273, %v272
  %v284 = vpack.c.b16 %v275, %v274
  %v285 = vpack.c.b16 %v277, %v276
  %v286 = vpack.c.b16 %v279, %v278
  %v287 = vpack.c.b16 %v281, %v280
  %vm293 = vcmask 736256
  %v295 = vsel %vm293, %v238, 0
  %v298 = vsel %vm130, %v287, 0
  %300 = vmatprep.subr.bf16.mxu0 0
  %301 = vmatpush1.bf16.msra.mxu0 %v282
  %302 = vmatprep.subr.bf16.mxu0 0
  %303 = vmatpush1.bf16.msra.mxu0 %v283
  %304 = vmatprep.subr.bf16.mxu0 0
  %305 = vmatpush1.bf16.msra.mxu0 %v284
  %306 = vmatprep.subr.bf16.mxu0 0
  %307 = vmatpush1.bf16.msra.mxu0 %v285
  %308 = vmatprep.subr.bf16.mxu0 0
  %309 = vmatpush1.bf16.msra.mxu0 %v286
  %310 = vmatprep.subr.bf16.mxu0 0
  %311 = vmatpush1.bf16.msra.mxu0 %v298
  %312 = vmatprep.subr.bf16.mxu0 0
  %313 = vmatpush1.bf16.msra.mxu0 0
  %314 = vmatprep.subr.bf16.mxu0 0
  %315 = vmatpush1.bf16.msra.mxu0 0
  %316 = vmatprep.subr.bf16.mxu0 0
  %317 = vmatpush1.bf16.msra.mxu0 0
  %318 = vmatprep.subr.bf16.mxu0 0
  %319 = vmatpush1.bf16.msra.mxu0 0
  %320 = vmatprep.subr.bf16.mxu0 0
  %321 = vmatpush1.bf16.msra.mxu0 0
  %322 = vmatprep.subr.bf16.mxu0 0
  %323 = vmatpush1.bf16.msra.mxu0 0
  %324 = vmatprep.subr.bf16.mxu0 0
  %325 = vmatpush1.bf16.msra.mxu0 0
  %326 = vmatprep.subr.bf16.mxu0 0
  %327 = vmatpush1.bf16.msra.mxu0 0
  %328 = vmatprep.subr.bf16.mxu0 0
  %329 = vmatpush1.bf16.msra.mxu0 0
  %330 = vmatprep.subr.bf16.mxu0 0
  %331 = vmatpush1.bf16.msra.mxu0 0
  %332 = vmatprep.mubr.bf16.mxu0 0
  %333 = vmatmul.mubr.bf16.gmra.mrb[0].mxu0 %v295
  %v334 = vpop.f32.mrb[0].mxu0
  %v335 = vadd.f32 %v256, %v334
  %v336 = vpop.f32.mrb[0].mxu0
  %v337 = vpop.f32.mrb[0].mxu0
  %v338 = vpop.f32.mrb[0].mxu0
  %339 = vdwg.mxu0
  %v340 = vmax.f32 %v335, 0.0
  %v341 = vpack.c.bf16 %v340, %v340
  %v342 = vld [vmem:[%s9] sm:$0xf]
  %v343 = vld [vmem:[%s9 + $0x4] sm:$0xf]
  %v344 = vld [vmem:[%s9 + $0x8] sm:$0xf]
  %v345 = vld [vmem:[%s9 + $0xc] sm:$0xf]
  %v346 = vld [vmem:[%s9 + $0x10] sm:$0xf]
  %v347 = vld [vmem:[%s9 + $0x14] sm:$0xf]
  %v348 = vld [vmem:[%s9 + $0x18] sm:$0xf]
  %v349 = vld [vmem:[%s9 + $0x1c] sm:$0xf]
  %v350 = vld [vmem:[%s9 + $0x20] sm:$0xf]
  %v351 = vld [vmem:[%s9 + $0x24] sm:$0xf]
  %v352 = vld [vmem:[%s9 + $0x28] sm:$0x3]
  %v353 = vld [vmem:[#allocation2] sm:$0x1]
  %v355 = vlaneseq
  %v356 = vshrl.u32 %v355, 7
  %v357 = vsub.s32 0, %v356
  %v358 = vrot.slane %v353, %v357
  %v371 = vunpack.c.l.b16 %v342
  %v372 = vunpack.c.l.b16 %v343
  %v373 = vunpack.c.l.b16 %v344
  %v374 = vunpack.c.l.b16 %v345
  %v375 = vunpack.c.l.b16 %v346
  %v376 = vunpack.c.l.b16 %v347
  %v377 = vunpack.c.l.b16 %v348
  %v378 = vunpack.c.l.b16 %v349
  %v379 = vunpack.c.l.b16 %v350
  %v380 = vunpack.c.l.b16 %v351
  %v381 = vunpack.c.l.b16 %v352
  %v382 = vpack.c.b16 %v372, %v371
  %v383 = vpack.c.b16 %v374, %v373
  %v384 = vpack.c.b16 %v376, %v375
  %v385 = vpack.c.b16 %v378, %v377
  %v386 = vpack.c.b16 %v380, %v379
  %v387 = vpack.c.b16 %v381, %v381
  %vm393 = vcmask 687104
  %v395 = vsel %vm393, %v341, 0
  %vm397 = vcmask 1041408
  %v399 = vsel %vm397, %v387, 0
  %401 = vmatprep.subr.bf16.mxu0 0
  %402 = vmatpush1.bf16.msra.mxu0 %v382
  %403 = vmatprep.subr.bf16.mxu0 0
  %404 = vmatpush1.bf16.msra.mxu0 %v383
  %405 = vmatprep.subr.bf16.mxu0 0
  %406 = vmatpush1.bf16.msra.mxu0 %v384
  %407 = vmatprep.subr.bf16.mxu0 0
  %408 = vmatpush1.bf16.msra.mxu0 %v385
  %409 = vmatprep.subr.bf16.mxu0 0
  %410 = vmatpush1.bf16.msra.mxu0 %v386
  %411 = vmatprep.subr.bf16.mxu0 0
  %412 = vmatpush1.bf16.msra.mxu0 %v399
  %413 = vmatprep.subr.bf16.mxu0 0
  %414 = vmatpush1.bf16.msra.mxu0 0
  %415 = vmatprep.subr.bf16.mxu0 0
  %416 = vmatpush1.bf16.msra.mxu0 0
  %417 = vmatprep.subr.bf16.mxu0 0
  %418 = vmatpush1.bf16.msra.mxu0 0
  %419 = vmatprep.subr.bf16.mxu0 0
  %420 = vmatpush1.bf16.msra.mxu0 0
  %421 = vmatprep.subr.bf16.mxu0 0
  %422 = vmatpush1.bf16.msra.mxu0 0
  %423 = vmatprep.subr.bf16.mxu0 0
  %424 = vmatpush1.bf16.msra.mxu0 0
  %425 = vmatprep.subr.bf16.mxu0 0
  %426 = vmatpush1.bf16.msra.mxu0 0
  %427 = vmatprep.subr.bf16.mxu0 0
  %428 = vmatpush1.bf16.msra.mxu0 0
  %429 = vmatprep.subr.bf16.mxu0 0
  %430 = vmatpush1.bf16.msra.mxu0 0
  %431 = vmatprep.subr.bf16.mxu0 0
  %432 = vmatpush1.bf16.msra.mxu0 0
  %433 = vmatprep.mubr.bf16.mxu0 0
  %434 = vmatmul.mubr.bf16.gmra.mrb[0].mxu0 %v395
  %v435 = vpop.f32.mrb[0].mxu0
  %v436 = vadd.f32 %v358, %v435
  %v437 = vpop.f32.mrb[0].mxu0
  %v438 = vpop.f32.mrb[0].mxu0
  %v439 = vpop.f32.mrb[0].mxu0
  %440 = vdwg.mxu0
  %vm441 = vcmask 1024
  %442 = vst.msk [vmem:[%s11] sm:$0x3] %vm441, %v436
  // Predicated region
  $region46: #{tpu_custom_call.1} parent=0 // pred_check
    _
  $region47: #{tpu_custom_call.1} parent=0 // pred_check_branch
    %444 = sbr.rel (0) target = $region49
  $region48: #{tpu_custom_call.1} parent=0 // pred_region
    _
  $region49: #{tpu_custom_call.1} parent=0 // pred_fallthru
    _
  // Predicated region
  $region50: #{tpu_custom_call.1} parent=0 // pred_check
    _
  $region51: #{tpu_custom_call.1} parent=0 // pred_check_branch
    %446 = sbr.rel (0) target = $region53
  $region52: #{tpu_custom_call.1} parent=0 // pred_region
    _
  $region53: #{tpu_custom_call.1} parent=0 // pred_fallthru
    _

</llo_original>
